<compile_context>
chip_gen: v7x
topology: tpu7x:2x2x1
jax: 0.10.0
libtpu: 0.0.40
codegen_flags: <defaults>
</compile_context>

<pallas_src>
import functools

import jax
import jax.numpy as jnp
from jax.experimental import pallas as pl
from jax.experimental.pallas import tpu as pltpu

ALPHA = 0.5
GAMMA = 1

_LANES = 128
_SUBLANES = 8
_NUM_SPLITS = 2                # leading grid axis; sharded across TCs on megacore
_MAX_BLOCK_ROWS = 2048         # 2048 * 128 * 4 B = 1 MiB per f32 input block
_TARGET_STEPS_PER_SPLIT = 4    # keep the pipeline in steady state per core


def _cdiv(a, b):
    return -(-a // b)


def _round_up(a, b):
    return _cdiv(a, b) * b


def _min_rows_for(dtype):
    # Min second-to-last tile dim for the dtype: f32 -> 8, bf16 -> 16, int8/bool -> 32.
    itemsize = jnp.dtype(dtype).itemsize
    return {4: 8, 2: 16, 1: 32}.get(itemsize, 8)


def _focal_loss_kernel(x_ref, t_ref, out_ref, *, block_rows, steps, rows_valid,
                       first_masked_block, num_blocks_grid):
    c = pl.program_id(0)   # split index (TensorCore shard)
    i = pl.program_id(1)   # reduction step within this split

    @pl.when(i == 0)
    def _():
        out_ref[...] = jnp.zeros_like(out_ref)

    x = x_ref[...].astype(jnp.float32)
    t = t_ref[...].astype(jnp.float32)

    # Canonical numerically-stable BCE-with-logits:
    #   bce = max(x, 0) - x*t + log1p(exp(-|x|))
    # Matches sigmoid->binary_cross_entropy for all non-saturating logits
    # (|x| < ~16.6 in f32); torch's -100 log-clamp is inactive in that range.
    bce_el = jnp.maximum(x, 0.0) - x * t + jnp.log1p(jnp.exp(-jnp.abs(x)))

    def accum(vals):
        # Fold block rows down to an (8,128) vector partial sum (pure VPU adds);
        # the single cross-lane reduce happens in the wrapper on 2*8*128 floats.
        out_ref[0] += jnp.sum(
            vals.reshape(block_rows // _SUBLANES, _SUBLANES, _LANES), axis=0)

    if first_masked_block >= num_blocks_grid:
        # Every grid block is fully in-bounds: no mask code at all.
        accum(bce_el)
    else:
        g = c * steps + i  # logical (unclamped) global block index

        if first_masked_block > 0:
            @pl.when(g < first_masked_block)
            def _():
                accum(bce_el)

        @pl.when(g >= first_masked_block)
        def _():
            # Only the boundary / overhang block(s) pay the mask at runtime.
            row_ids = jax.lax.broadcasted_iota(jnp.int32, bce_el.shape, 0)
            valid = (g * block_rows + row_ids) < rows_valid
            accum(jnp.where(valid, bce_el, 0.0))


def focal_loss(inputs, targets, alpha=ALPHA, gamma=GAMMA, smooth=1):
    """Pallas TPU implementation of FocalLoss.forward. Returns a scalar f32."""
    del smooth  # unused in the reference forward as well
    x_flat = inputs.reshape(-1)
    t_flat = targets.reshape(-1)
    n = x_flat.shape[0]

    min_rows = max(_min_rows_for(x_flat.dtype), _min_rows_for(t_flat.dtype))
    rows_exact = _cdiv(n, _LANES)
    block_rows = min(
        _MAX_BLOCK_ROWS,
        max(min_rows,
            _round_up(_cdiv(rows_exact, _NUM_SPLITS * _TARGET_STEPS_PER_SPLIT),
                      min_rows)),
    )

    if (n % _LANES != 0) or (rows_exact < block_rows):
        # TODO(synk): this branch re-materializes the inputs once (jnp.pad copies);
        # it is only taken when n is not a multiple of 128 or the input is tiny.
        # Neutral pad values: x=+100, t=1  ->  bce = 100 - 100 + log1p(exp(-100)) = 0,
        # so padded elements contribute nothing and need no mask.
        rows_arr = max(rows_exact, block_rows)
        pad = rows_arr * _LANES - n
        x2 = jnp.pad(x_flat, (0, pad), constant_values=100).reshape(rows_arr, _LANES)
        t2 = jnp.pad(t_flat, (0, pad), constant_values=1).reshape(rows_arr, _LANES)
    else:
        # Free bitcast reshape: no extra HBM traffic, inputs read exactly once.
        rows_arr = rows_exact
        x2 = x_flat.reshape(rows_arr, _LANES)
        t2 = t_flat.reshape(rows_arr, _LANES)

    total_blocks = _cdiv(rows_arr, block_rows)
    steps = _cdiv(total_blocks, _NUM_SPLITS)
    num_blocks_grid = _NUM_SPLITS * steps
    # Blocks at/after this logical index may contain rows >= rows_arr (DMA'd
    # garbage from a partial tile or the grid-overhang block) and get masked.
    first_masked_block = rows_arr // block_rows

    if num_blocks_grid > total_blocks:
        # Clamp so the (single) overhang block never indexes past the array;
        # its contribution is fully masked out in the kernel.
        def row_block(c, i):
            return (jnp.minimum(c * steps + i, total_blocks - 1), 0)
    else:
        def row_block(c, i):
            return (c * steps + i, 0)

    blk = pl.BlockSpec((block_rows, _LANES), row_block)
    kernel = functools.partial(
        _focal_loss_kernel,
        block_rows=block_rows,
        steps=steps,
        rows_valid=rows_arr,
        first_masked_block=first_masked_block,
        num_blocks_grid=num_blocks_grid,
    )

    partials = pl.pallas_call(
        kernel,
        out_shape=jax.ShapeDtypeStruct((_NUM_SPLITS, _SUBLANES, _LANES), jnp.float32),
        grid_spec=pltpu.PrefetchScalarGridSpec(
            num_scalar_prefetch=0,
            grid=(_NUM_SPLITS, steps),
            in_specs=[blk, blk],
            out_specs=pl.BlockSpec((1, _SUBLANES, _LANES), lambda c, i: (c, 0, 0)),
        ),
        compiler_params=pltpu.CompilerParams(
            dimension_semantics=("parallel", "arbitrary"),
        ),
    )(x2, t2)

    # Tiny epilogue in the wrapper: combine the per-core vector partials.
    bce = jnp.sum(partials) / jnp.float32(n)
    bce_exp = jnp.exp(-bce)
    return jnp.float32(alpha) * (1.0 - bce_exp) ** gamma * bce


def _focal_loss_ref(inputs, targets, alpha=ALPHA, gamma=GAMMA):
    # Mirrors the PyTorch module: sigmoid -> BCE(mean) with torch's -100 log clamp.
    p = jax.nn.sigmoid(inputs.reshape(-1).astype(jnp.float32))
    t = targets.reshape(-1).astype(jnp.float32)
    log_p = jnp.maximum(jnp.log(p), -100.0)
    log_1mp = jnp.maximum(jnp.log(1.0 - p), -100.0)
    bce = jnp.mean(-(t * log_p + (1.0 - t) * log_1mp))
    return alpha * (1.0 - jnp.exp(-bce)) ** gamma * bce


if __name__ == "__main__":
    key = jax.random.PRNGKey(0)
    kx, kt = jax.random.split(key)
    # NCHW logits and binary targets, matching the PyTorch module's typical use.
    x = jax.random.normal(kx, (2, 4, 16, 16), dtype=jnp.float32)
    t = (jax.random.uniform(kt, (2, 4, 16, 16)) > 0.5).astype(jnp.float32)

    loss = focal_loss(x, t)
    jax.block_until_ready(loss)

    ref = _focal_loss_ref(x, t)
    assert jnp.allclose(loss, ref, rtol=1e-5, atol=1e-5), (loss, ref)
    print("KERNEL_OK")
</pallas_src>

<mosaic_0001>
module attributes {stable_mosaic.version = 11 : i64} {
  func.func @_focal_loss_kernel(%arg0: i32, %arg1: i32, %arg2: memref<8x128xf32, #tpu.memory_space<vmem>>, %arg3: memref<8x128xf32, #tpu.memory_space<vmem>>, %arg4: memref<1x8x128xf32, #tpu.memory_space<vmem>>) attributes {dimension_semantics = [#tpu.dimension_semantics<parallel>, #tpu.dimension_semantics<arbitrary>], iteration_bounds = array<i64: 2, 1>, scalar_prefetch = 0 : i64, scratch_operands = 0 : i64, tpu.core_type = #tpu.core_type<tc>, window_params = [{transform_indices = @transform_0, window_bounds = array<i64: 8, 128>}, {transform_indices = @transform_1, window_bounds = array<i64: 8, 128>}, {transform_indices = @transform_2, window_bounds = array<i64: 1, 8, 128>}]} {
    %c0_i32 = arith.constant 0 : i32
    %0 = arith.cmpi eq, %arg1, %c0_i32 : i32
    %1 = arith.extui %0 : i1 to i32
    %c0_i32_0 = arith.constant 0 : i32
    %2 = arith.cmpi ne, %1, %c0_i32_0 : i32
    scf.if %2 {
      %cst_12 = arith.constant 0.000000e+00 : f32
      %23 = vector.broadcast %cst_12 : f32 to vector<1x8x128xf32>
      %c0_13 = arith.constant 0 : index
      %c0_14 = arith.constant 0 : index
      %c0_15 = arith.constant 0 : index
      %24 = vector.load %arg4[%c0_13, %c0_14, %c0_15] : memref<1x8x128xf32, #tpu.memory_space<vmem>>, vector<1x8x128xf32>
      tpu.vector_store %arg4[%c0_13, %c0_14, %c0_15], %23 {strides = array<i32>} : memref<1x8x128xf32, #tpu.memory_space<vmem>>, vector<1x8x128xf32>,
    } else {
    }
    %c0 = arith.constant 0 : index
    %c0_1 = arith.constant 0 : index
    %3 = vector.load %arg2[%c0, %c0_1] : memref<8x128xf32, #tpu.memory_space<vmem>>, vector<8x128xf32>
    %c0_2 = arith.constant 0 : index
    %c0_3 = arith.constant 0 : index
    %4 = vector.load %arg3[%c0_2, %c0_3] : memref<8x128xf32, #tpu.memory_space<vmem>>, vector<8x128xf32>
    %cst = arith.constant 0.000000e+00 : f32
    %5 = vector.broadcast %cst : f32 to vector<8x128xf32>
    %6 = arith.maximumf %3, %5 : vector<8x128xf32>
    %7 = arith.mulf %3, %4 : vector<8x128xf32>
    %8 = arith.subf %6, %7 : vector<8x128xf32>
    %9 = math.absf %3 : vector<8x128xf32>
    %cst_4 = arith.constant 0.000000e+00 : f32
    %10 = vector.broadcast %cst_4 : f32 to vector<8x128xf32>
    %11 = arith.subf %10, %9 : vector<8x128xf32>
    %12 = math.exp %11 : vector<8x128xf32>
    %13 = math.log1p %12 : vector<8x128xf32>
    %14 = arith.addf %8, %13 : vector<8x128xf32>
    %c0_5 = arith.constant 0 : index
    %c0_6 = arith.constant 0 : index
    %c0_7 = arith.constant 0 : index
    %15 = vector.load %arg4[%c0_5, %c0_6, %c0_7] : memref<1x8x128xf32, #tpu.memory_space<vmem>>, vector<1x8x128xf32>
    %16 = vector.shape_cast %15 : vector<1x8x128xf32> to vector<8x128xf32>
    %17 = vector.shape_cast %14 : vector<8x128xf32> to vector<1x8x128xf32>
    %cst_8 = arith.constant dense<0.000000e+00> : vector<8x128xf32>
    %18 = vector.multi_reduction <add>, %17, %cst_8 [0] : vector<1x8x128xf32> to vector<8x128xf32>
    %19 = arith.addf %16, %18 : vector<8x128xf32>
    %c0_9 = arith.constant 0 : index
    %c0_10 = arith.constant 0 : index
    %c0_11 = arith.constant 0 : index
    %20 = vector.load %arg4[%c0_9, %c0_10, %c0_11] : memref<1x8x128xf32, #tpu.memory_space<vmem>>, vector<1x8x128xf32>
    %21 = vector.shape_cast %20 : vector<1x8x128xf32> to vector<8x128xf32>
    %22 = vector.shape_cast %19 : vector<8x128xf32> to vector<1x8x128xf32>
    tpu.vector_store %arg4[%c0_9, %c0_10, %c0_11], %22 {strides = array<i32>} : memref<1x8x128xf32, #tpu.memory_space<vmem>>, vector<1x8x128xf32>,
    return
  }
  func.func @transform_0(%arg0: i32, %arg1: i32) -> (i32, i32) {
    %c1_i32 = arith.constant 1 : i32
    %0 = arith.muli %arg0, %c1_i32 : i32
    %1 = arith.addi %0, %arg1 : i32
    %c0_i32 = arith.constant 0 : i32
    %c0_i32_0 = arith.constant 0 : i32
    return %1, %c0_i32 : i32, i32
  }
  func.func @transform_1(%arg0: i32, %arg1: i32) -> (i32, i32) {
    %c1_i32 = arith.constant 1 : i32
    %0 = arith.muli %arg0, %c1_i32 : i32
    %1 = arith.addi %0, %arg1 : i32
    %c0_i32 = arith.constant 0 : i32
    %c0_i32_0 = arith.constant 0 : i32
    return %1, %c0_i32 : i32, i32
  }
  func.func @transform_2(%arg0: i32, %arg1: i32) -> (i32, i32, i32) {
    %c0_i32 = arith.constant 0 : i32
    %c0_i32_0 = arith.constant 0 : i32
    %c0_i32_1 = arith.constant 0 : i32
    return %arg0, %c0_i32, %c0_i32_0 : i32, i32, i32
  }
}

</mosaic_0001>

<llo_original>
// kernel: tpu_custom_call.1
$region0: #{tpu_custom_call.1}
  #allocation0 [shape = 'u32[]', space=smem, size = 0x4, offset = 0x4, fixed_abs, tag = 'smem constant byte address 0x4 - core index']
  #allocation1 [shape = 'u32[144,128]{1,0:T(1,128)}', space=vmem, size = 0x12000, scoped, tag = 'internal scratch']
  %s0 = inlined_call_operand.hbm [shape: f32[16,128], index: 0, kind: input, shape index: {}]
  %s1 = inlined_call_operand.hbm [shape: f32[16,128], index: 1, kind: input, shape index: {}]
  %s2 = inlined_call_operand.hbm [shape: f32[2,8,128], index: 2, kind: output, shape index: {}]
  %s3 = sld [smem:[#allocation0]]
  $region53: #{tpu_custom_call.1} parent=0
    _
  %s5 = ssub.s32 1, %s3
  %s6 = scalar_select 0, %s5, %s3
  $region1: #{tpu_custom_call.1} parent=0
    #allocation2 [shape = 'u8[8192]{0}', space=vmem, size = 0x2000, scoped, tag = 'input window, operand 0']
    #allocation3 [shape = 's32[2]{0}', space=sflag, size = 0x8, scoped, tag = 'scoped memory for tpu_custom_call.1']
    #allocation4 [shape = 's32[2]{0}', space=sflag, size = 0x8, scoped, tag = 'scoped memory for tpu_custom_call.1']
    #allocation5 [shape = 'u8[8192]{0}', space=vmem, size = 0x2000, scoped, tag = 'input window, operand 1']
    #allocation6 [shape = 's32[2]{0}', space=sflag, size = 0x8, scoped, tag = 'scoped memory for tpu_custom_call.1']
    #allocation7 [shape = 'u8[8192]{0}', space=vmem, size = 0x2000, scoped, tag = 'output window, operand 0']
    %7 = vsyncpa [#allocation3], 0
    %s8 = scalar_lea.sflag [#allocation3], 1
    %9 = vsyncpa %s8, 0
    %10 = vsyncpa [#allocation6], 0
    %s11 = scalar_lea.sflag [#allocation6], 1
    %12 = vsyncpa %s11, 0
    %13 = vsyncpa [#allocation4], 0
    %s14 = scalar_lea.sflag [#allocation4], 1
    %15 = vsyncpa %s14, 0
    loop: start=0, step=1, limit=4
    $region2: #{tpu_custom_call.1} parent=1 // loop_pre_header
      _
    $region3: #{tpu_custom_call.1} parent=1 // loop_header
      %s17 = sphi 0, %s21
      %p18 = scmp.ge.s32.totalorder %s17, 4
      %s24 = sphi 0, %s36
      %s25 = sphi 0, %s32
      %s26 = sphi 0, %s24
      %s27 = sphi 0, %s25
      %s28 = sphi 0, %s26
      %s29 = sphi 0, %s27
      %s41 = sphi 0, %s43
      %s44 = sphi 0, %s41
      %s45 = sphi 0, %s44
      %s61 = sphi 0, %s45
      %s69 = sphi 0, %s71
      %s72 = sphi 0, %s69
      %s73 = sphi 0, %s72
      %s89 = sphi 0, %s73
      %s95 = sphi 0, %s97
      %s98 = sphi 0, %s95
      %s99 = sphi 0, %s98
      %s115 = sphi 0, %s99
    $region4: #{tpu_custom_call.1} parent=1 // loop_header_branch
      %20 = sbr.rel (%p18) target = $region8
    $region5: #{tpu_custom_call.1} parent=1 // loop_body
      %s22 = ssub.s32 %s17, 1
      %s23 = ssub.s32 %s17, 2
      %s30 = sadd.s32 1, %s25
      %p31 = scmp.ge.s32.totalorder %s30, 1
      %s32 = scalar_select %p31, 0, %s30
      %s33 = sadd.s32 1, %s24
      %s34 = scalar_select %p31, %s33, %s24
      %p35 = scmp.ge.s32.totalorder %s34, 2
      %s36 = scalar_select %p35, 0, %s34
      %s37 = sadd.s32 %s24, %s25
      %s38 = sadd.s32 %s36, %s32
      %s39 = ssub.s32 %s37, %s38
      %p40 = scmp.eq.s32.totalorder %s39, 0
      %s42 = sadd.s32 %s41, 1
      %s43 = scalar_select %p40, %s41, %s42
      %p46 = pneg %p40
      %p47 = scmp.eq.s32.totalorder %s17, 1
      %p48 = por %p46, %p47
      %p49 = scmp.ne.s32.totalorder %s41, %s44
      %p50 = scmp.eq.s32.totalorder %s17, 0
      %p51 = por %p49, %p50
      %p52 = scmp.ne.s32.totalorder %s41, %s44
      %p53 = scmp.eq.s32.totalorder %s22, 1
      %p54 = por %p52, %p53
      %p55 = scmp.ne.s32.totalorder %s44, %s45
      %p56 = scmp.eq.s32.totalorder %s22, 0
      %p57 = por %p55, %p56
      %p58 = scmp.ne.s32.totalorder %s44, %s45
      %p59 = scmp.eq.s32.totalorder %s23, 1
      %p60 = por %p58, %p59
      %p62 = scmp.ne.s32.totalorder %s45, %s61
      %p63 = scmp.eq.s32.totalorder %s23, 0
      %p64 = por %p62, %p63
      %s65 = sadd.s32 %s24, %s25
      %s66 = sadd.s32 %s36, %s32
      %s67 = ssub.s32 %s65, %s66
      %p68 = scmp.eq.s32.totalorder %s67, 0
      %s70 = sadd.s32 %s69, 1
      %s71 = scalar_select %p68, %s69, %s70
      %p74 = pneg %p68
      %p75 = scmp.eq.s32.totalorder %s17, 1
      %p76 = por %p74, %p75
      %p77 = scmp.ne.s32.totalorder %s69, %s72
      %p78 = scmp.eq.s32.totalorder %s17, 0
      %p79 = por %p77, %p78
      %p80 = scmp.ne.s32.totalorder %s69, %s72
      %p81 = scmp.eq.s32.totalorder %s22, 1
      %p82 = por %p80, %p81
      %p83 = scmp.ne.s32.totalorder %s72, %s73
      %p84 = scmp.eq.s32.totalorder %s22, 0
      %p85 = por %p83, %p84
      %p86 = scmp.ne.s32.totalorder %s72, %s73
      %p87 = scmp.eq.s32.totalorder %s23, 1
      %p88 = por %p86, %p87
      %p90 = scmp.ne.s32.totalorder %s73, %s89
      %p91 = scmp.eq.s32.totalorder %s23, 0
      %p92 = por %p90, %p91
      %s93 = ssub.s32 %s24, %s36
      %p94 = scmp.eq.s32.totalorder %s93, 0
      %s96 = sadd.s32 %s95, 1
      %s97 = scalar_select %p94, %s95, %s96
      %p100 = pneg %p94
      %p101 = scmp.eq.s32.totalorder %s17, 1
      %p102 = por %p100, %p101
      %p103 = scmp.ne.s32.totalorder %s95, %s98
      %p104 = scmp.eq.s32.totalorder %s17, 0
      %p105 = por %p103, %p104
      %p106 = scmp.ne.s32.totalorder %s95, %s98
      %p107 = scmp.eq.s32.totalorder %s22, 1
      %p108 = por %p106, %p107
      %p109 = scmp.ne.s32.totalorder %s98, %s99
      %p110 = scmp.eq.s32.totalorder %s22, 0
      %p111 = por %p109, %p110
      %p112 = scmp.ne.s32.totalorder %s98, %s99
      %p113 = scmp.eq.s32.totalorder %s23, 1
      %p114 = por %p112, %p113
      %p116 = scmp.ne.s32.totalorder %s99, %s115
      %p117 = scmp.eq.s32.totalorder %s23, 0
      %p118 = por %p116, %p117
      %p119 = scmp.le.s32.totalorder 1, %s17
      %p120 = scmp.lt.s32.totalorder %s17, 3
      %p121 = pnand %p119, %p120
      %p122 = pneg %p121
      // Predicated region
      $region9: #{tpu_custom_call.1} parent=5 // pred_check
        _
      $region10: #{tpu_custom_call.1} parent=5 // pred_check_branch
        %124 = sbr.rel (%p121) target = $region12
      $region11: #{tpu_custom_call.1} parent=5 // pred_region
        %s125 = ssub.s32 %s17, 1
      $region12: #{tpu_custom_call.1} parent=5 // pred_fallthru
        _
      %p126 = scmp.lt.s32.totalorder %s17, 2
      // Predicated region
      $region13: #{tpu_custom_call.1} parent=5 // pred_check
        %p127 = pneg %p126
      $region14: #{tpu_custom_call.1} parent=5 // pred_check_branch
        %129 = sbr.rel (%p127) target = $region16
      $region15: #{tpu_custom_call.1} parent=5 // pred_region
        // Predicated region
        $region17: #{tpu_custom_call.1} parent=15 // pred_check
          %p130 = pneg %p51
        $region18: #{tpu_custom_call.1} parent=15 // pred_check_branch
          %132 = sbr.rel (%p130) target = $region20
        $region19: #{tpu_custom_call.1} parent=15 // pred_region
          %s133 = sand.u32 %s41, 1
          %s134 = scalar_lea.sflag [#allocation3], %s133
          %s135 = sand.u32 %s41, 1
          %s136 = smul.addr %s135, 8
          %s137 = scalar_lea.vmem [#allocation2], %s136
          %s138 = sadd.s32 %s24, %s25
          %s140 = ssub.s32 128, 128
          %141 = vsyncadd %s134, %s140
          %s142 = smul.addr %s138, 128
          %s143 = scalar_lea.hbm %s0, %s142
          %s145 = sshll.u32 %s137, 4
          %s146 = int_to_ptr.vmem [resolvable:$true] %s145
          %148 = dma.hbm_to_vmem [thread:$0]  %s143, 128, %s146, %s134
        $region20: #{tpu_custom_call.1} parent=15 // pred_fallthru
          _
        // Predicated region
        $region21: #{tpu_custom_call.1} parent=15 // pred_check
          %p149 = pneg %p79
        $region22: #{tpu_custom_call.1} parent=15 // pred_check_branch
          %151 = sbr.rel (%p149) target = $region24
        $region23: #{tpu_custom_call.1} parent=15 // pred_region
          %s152 = sand.u32 %s69, 1
          %s153 = scalar_lea.sflag [#allocation6], %s152
          %s154 = sand.u32 %s69, 1
          %s155 = smul.addr %s154, 8
          %s156 = scalar_lea.vmem [#allocation5], %s155
          %s157 = sadd.s32 %s24, %s25
          %s159 = ssub.s32 128, 128
          %160 = vsyncadd %s153, %s159
          %s161 = smul.addr %s157, 128
          %s162 = scalar_lea.hbm %s1, %s161
          %s164 = sshll.u32 %s156, 4
          %s165 = int_to_ptr.vmem [resolvable:$true] %s164
          %167 = dma.hbm_to_vmem [thread:$0]  %s162, 128, %s165, %s153
        $region24: #{tpu_custom_call.1} parent=15 // pred_fallthru
          _
      $region16: #{tpu_custom_call.1} parent=5 // pred_fallthru
        _
      %p168 = scmp.le.s32.totalorder 1, %s17
      %p169 = scmp.lt.s32.totalorder %s17, 3
      %p170 = pnand %p168, %p169
      %p171 = pneg %p170
      // Predicated region
      $region25: #{tpu_custom_call.1} parent=5 // pred_check
        _
      $region26: #{tpu_custom_call.1} parent=5 // pred_check_branch
        %173 = sbr.rel (%p170) target = $region28
      $region27: #{tpu_custom_call.1} parent=5 // pred_region
        %s174 = ssub.s32 %s17, 1
        %s175 = sand.u32 %s44, 1
        %s176 = scalar_lea.sflag [#allocation3], %s175
        %s177 = sand.u32 %s44, 1
        %s178 = smul.addr %s177, 8
        %s179 = scalar_lea.vmem [#allocation2], %s178
        // Predicated region
        $region29: #{tpu_custom_call.1} parent=27 // pred_check
          %p180 = pneg %p57
        $region30: #{tpu_custom_call.1} parent=27 // pred_check_branch
          %182 = sbr.rel (%p180) target = $region32
        $region31: #{tpu_custom_call.1} parent=27 // pred_region
          %183 = dma.done %s176, 128
        $region32: #{tpu_custom_call.1} parent=27 // pred_fallthru
          _
        %s184 = sand.u32 %s72, 1
        %s185 = scalar_lea.sflag [#allocation6], %s184
        %s186 = sand.u32 %s72, 1
        %s187 = smul.addr %s186, 8
        %s188 = scalar_lea.vmem [#allocation5], %s187
        // Predicated region
        $region33: #{tpu_custom_call.1} parent=27 // pred_check
          %p189 = pneg %p85
        $region34: #{tpu_custom_call.1} parent=27 // pred_check_branch
          %191 = sbr.rel (%p189) target = $region36
        $region35: #{tpu_custom_call.1} parent=27 // pred_region
          %192 = dma.done %s185, 128
        $region36: #{tpu_custom_call.1} parent=27 // pred_fallthru
          _
        %s193 = sand.u32 %s44, 1
        %s194 = scalar_lea.sflag [#allocation3], %s193
        %s195 = sand.u32 %s44, 1
        %s196 = smul.addr %s195, 8
        %s197 = scalar_lea.vmem [#allocation2], %s196
        %p198 = pneg %p57
        %p199 = pneg %p54
        %s200 = sand.u32 %s72, 1
        %s201 = scalar_lea.sflag [#allocation6], %s200
        %s202 = sand.u32 %s72, 1
        %s203 = smul.addr %s202, 8
        %s204 = scalar_lea.vmem [#allocation5], %s203
        %p205 = pneg %p85
        %p206 = pneg %p82
        %p207 = pneg %p111
        %p208 = pneg %p108
        %s209 = sand.u32 %s98, 1
        %s210 = scalar_lea.sflag [#allocation4], %s209
        %s211 = sand.u32 %s98, 1
        %s212 = smul.addr %s211, 8
        %s213 = scalar_lea.vmem [#allocation7], %s212
        %s214 = sadd.s32 %s26, %s27
        %s215 = sadd.s32 %s26, %s27
        %p216 = scmp.eq.s32.totalorder %s27, 0
        // Predicated region
        $region37: #{tpu_custom_call.1} parent=27 // pred_check
          %p217 = pneg %p216
        $region38: #{tpu_custom_call.1} parent=27 // pred_check_branch
          %219 = sbr.rel (%p217) target = $region40
        $region39: #{tpu_custom_call.1} parent=27 // pred_region
          %220 = vst [vmem:[%s213] sm:$0xff] 0.0
        $region40: #{tpu_custom_call.1} parent=27 // pred_fallthru
          _
        %v221 = vld [vmem:[%s179] sm:$0xff]
        %v222 = vld [vmem:[%s188] sm:$0xff]
        %v223 = vmax.f32 %v221, 0.0
        %v224 = vmul.f32 %v221, %v222
        %v225 = vsub.f32 %v223, %v224
        %v226 = vand.u32 2147483647, %v221
        %v227 = vsub.f32 0.0, %v226
        %v228 = vmul.f32 %v227, 1.442695
        %v229 = vpow.pop %v228
        %v230 = vadd.f32 %v229, 1.0
        %v231 = vlog2.pop %v230
        %v232 = vmul.f32 %v231, 0.6931472
        %v233 = vmul.f32 -0.5, %v229
        %v234 = vadd.f32 %v233, 1.0
        %v235 = vmul.f32 %v234, %v229
        %v236 = vand.u32 2147483647, %v229
        %vm237 = vcmp.lt.f32.partialorder %v236, 0.0004427343
        %v238 = vsel %vm237, %v235, %v232
        %v239 = vadd.f32 %v225, %v238
        %v240 = vld [vmem:[%s213] sm:$0xff]
        %v241 = vadd.f32 %v239, 0.0
        %v242 = vadd.f32 %v240, %v241
        %243 = vst [vmem:[%s213] sm:$0xff] %v242
        %s244 = sand.u32 %s98, 1
        %s245 = scalar_lea.sflag [#allocation4], %s244
        %s246 = sand.u32 %s98, 1
        %s247 = smul.addr %s246, 8
        %s248 = scalar_lea.vmem [#allocation7], %s247
        // Predicated region
        $region41: #{tpu_custom_call.1} parent=27 // pred_check
          %p249 = pneg %p108
        $region42: #{tpu_custom_call.1} parent=27 // pred_check_branch
          %251 = sbr.rel (%p249) target = $region44
        $region43: #{tpu_custom_call.1} parent=27 // pred_region
          %s253 = ssub.s32 128, 128
          %254 = vsyncadd %s245, %s253
          %s255 = smul.addr %s26, 128
          %s256 = scalar_lea.hbm %s2, %s255
          %s258 = sshll.u32 %s248, 4
          %s259 = int_to_ptr.vmem [resolvable:$true] %s258
          %261 = dma.vmem_to_hbm [thread:$0]  %s259, 128, %s256, %s245
        $region44: #{tpu_custom_call.1} parent=27 // pred_fallthru
          _
      $region28: #{tpu_custom_call.1} parent=5 // pred_fallthru
        _
      %p262 = scmp.le.s32.totalorder 2, %s17
      // Predicated region
      $region45: #{tpu_custom_call.1} parent=5 // pred_check
        %p263 = pneg %p262
      $region46: #{tpu_custom_call.1} parent=5 // pred_check_branch
        %265 = sbr.rel (%p263) target = $region48
      $region47: #{tpu_custom_call.1} parent=5 // pred_region
        %s266 = ssub.s32 %s17, 2
        // Predicated region
        $region49: #{tpu_custom_call.1} parent=47 // pred_check
          %p267 = pneg %p114
        $region50: #{tpu_custom_call.1} parent=47 // pred_check_branch
          %269 = sbr.rel (%p267) target = $region52
        $region51: #{tpu_custom_call.1} parent=47 // pred_region
          %s270 = sand.u32 %s99, 1
          %s271 = scalar_lea.sflag [#allocation4], %s270
          %s272 = sand.u32 %s99, 1
          %s273 = smul.addr %s272, 8
          %s274 = scalar_lea.vmem [#allocation7], %s273
          %275 = dma.done %s271, 128
        $region52: #{tpu_custom_call.1} parent=47 // pred_fallthru
          _
      $region48: #{tpu_custom_call.1} parent=5 // pred_fallthru
        _
    $region6: #{tpu_custom_call.1} parent=1 // loop_footer
      %s21 = sadd.s32 1, %s17
    $region7: #{tpu_custom_call.1} parent=1 // loop_footer_branch
      %16 = sbr.rel target = $region3
    $region8: #{tpu_custom_call.1} parent=1 // loop_exit
      _
    %276 = vsyncpa [#allocation3], 1
    %s277 = scalar_lea.sflag [#allocation3], 1
    %278 = vsyncpa %s277, 1
    %279 = vsyncpa [#allocation6], 1
    %s280 = scalar_lea.sflag [#allocation6], 1
    %281 = vsyncpa %s280, 1
    %282 = vsyncpa [#allocation4], 1
    %s283 = scalar_lea.sflag [#allocation4], 1
    %284 = vsyncpa %s283, 1

</llo_original>
